<compile_context>
chip_gen: v7x
topology: tpu7x:2x2x1
jax: 0.10.0
libtpu: 0.0.40
codegen_flags: <defaults>
</compile_context>

<pallas_src>
import math
from functools import partial

import jax
import jax.numpy as jnp
from jax.experimental import pallas as pl
from jax.experimental.pallas import tpu as pltpu


def _round_up(v, m):
    return ((v + m - 1) // m) * m


def _vmem_capacity_bytes():
    """Physical VMEM of the local TPU generation (conservative fallback = v7x 64 MiB)."""
    try:
        info = pltpu.get_tpu_info()
        cap = getattr(info, "vmem_capacity_bytes", None)
        if cap:
            return int(cap)
    except Exception:
        pass
    return 64 * 1024 * 1024


def _time_embedding_kernel(rel_ref, x_ref, wb_ref, o_ref, *, fold, d):
    # rel_ref: [T, fold]    f32      rel_t, one column per folded sub-row
    # x_ref:   [T, fold*d]  x.dtype
    # wb_ref:  [2, fold*d]  f32      row 0 = tiled weight, row 1 = 1 + tiled bias
    # o_ref:   [T, fold*d]  x.dtype
    rel = rel_ref[...]                                        # [T, fold] f32
    t_rows = rel.shape[0]
    if fold == 1:
        rel_wide = rel                                        # [T, 1] lane-broadcasts in the FMA
    else:
        # Expand each rel column across its D-lane group -> lane-dense [T, fold*d].
        # (Proven Mosaic lowering: per-column lane broadcast + lane concat.)
        rel_wide = jnp.concatenate(
            [jnp.broadcast_to(rel[:, j:j + 1], (t_rows, d)) for j in range(fold)],
            axis=1)
    # scale = 1 + bias + rel_t * weight  (single f32 FMA; '+1' pre-folded into wb row 1)
    scale = rel_wide * wb_ref[0:1, :] + wb_ref[1:2, :]
    # Single cast of the scale, final multiply in the native dtype (VALU trim).
    o_ref[...] = x_ref[...] * scale.astype(o_ref.dtype)


def time_embedding(x, last_update, t, weight, bias):
    """x: [N, D]; last_update, t: [N]; weight: [D, 1]; bias: [D] -> [N, D]."""
    n, d = x.shape
    assert weight.shape == (d, 1) and bias.shape == (d,), "Linear(1, D) params expected"

    # rel_t: subtract in the source dtype (keeps large-timestamp precision), then f32.
    rel = (last_update - t).astype(jnp.float32).reshape(n, 1)

    # Lane folding: pack `fold` consecutive rows into one lane-dense row (multiple of 128).
    if d % 128 == 0:
        fold = 1
    else:
        f0 = math.lcm(d, 128) // d
        fold = f0 if (n % f0 == 0) else 1
        # TODO(synk): when N is ragged w.r.t. fold we fall back to a lane-sparse
        # (masked-store) output layout; closing that cliff needs a small pad + output
        # slice (an extra HBM pass) which the review's top item rules out for the hot path.
    dl = fold * d                      # lane width of a block
    n_rows = n // fold                 # folded row count

    x_f = x.reshape(n_rows, dl)        # free reshape (contiguous)
    rel_f = rel.reshape(n_rows, fold)  # free reshape

    # Merged side input: row 0 = tiled weight, row 1 = 1 + tiled bias (fused '+1').
    w_row = weight.reshape(1, d).astype(jnp.float32)
    b1_row = 1.0 + bias.reshape(1, d).astype(jnp.float32)
    wb = jnp.concatenate([jnp.tile(w_row, (1, fold)),
                          jnp.tile(b1_row, (1, fold))], axis=0)      # [2, dl] f32

    # Per-generation tile / VMEM budgets.
    vmem_cap = _vmem_capacity_bytes()
    if vmem_cap >= 100 * (1 << 20):                 # v5e / v6e: 128 MiB physical VMEM
        block_budget, vmem_limit = 8 << 20, 64 << 20
    else:                                           # v7x: 64 MiB physical VMEM
        block_budget, vmem_limit = 4 << 20, 32 << 20

    isz = jnp.dtype(x.dtype).itemsize
    sub = 8 * max(1, 4 // isz)                      # sublane multiple: 8 f32, 16 bf16, 32 int8
    dl_pad = _round_up(dl, 128)
    # Double-buffered x + out blocks plus the rel block, which is lane-padded to 128
    # lanes (512 B/row f32) regardless of fold -- counted so it can't blow the budget.
    row_bytes = 2 * (2 * dl_pad * isz + 128 * 4)
    budget_rows = max(sub, (block_budget // row_bytes) // sub * sub)
    # Keep >= 4 grid steps when possible (v7x 2-TC sharding + pipeline overlap).
    steps_cap = max(sub, _round_up(pl.cdiv(n_rows, 4), sub))
    tile = min(budget_rows, steps_cap, _round_up(n_rows, sub))

    grid = (pl.cdiv(n_rows, tile),)                 # ragged tail handled by Pallas masking
    kernel = partial(_time_embedding_kernel, fold=fold, d=d)

    out_f = pl.pallas_call(
        kernel,
        out_shape=jax.ShapeDtypeStruct((n_rows, dl), x.dtype),
        grid=grid,
        in_specs=[
            pl.BlockSpec((tile, fold), lambda i: (i, 0)),   # rel_t
            pl.BlockSpec((tile, dl), lambda i: (i, 0)),     # x
            pl.BlockSpec((2, dl), lambda i: (0, 0)),        # [w ; 1 + b]
        ],
        out_specs=pl.BlockSpec((tile, dl), lambda i: (i, 0)),
        compiler_params=pltpu.CompilerParams(
            dimension_semantics=("parallel",),              # v7x: shard grid over 2 TCs
            vmem_limit_bytes=vmem_limit,
        ),
        cost_estimate=pl.CostEstimate(
            flops=3 * n * d,
            transcendentals=0,
            bytes_accessed=2 * n * d * isz + n * 4 + 2 * dl * 4,
        ),
    )(rel_f, x_f, wb)

    return out_f.reshape(n, d)          # free reshape, no slicing / no extra HBM pass


def _reference(x, last_update, t, weight, bias):
    rel_t = (last_update - t).astype(jnp.float32)[:, None]                 # [N, 1]
    emb = rel_t * weight.astype(jnp.float32).reshape(1, -1) + bias.astype(jnp.float32)[None, :]
    return (x.astype(jnp.float32) * (1.0 + emb)).astype(x.dtype)


if __name__ == "__main__":
    key = jax.random.PRNGKey(0)
    keys = jax.random.split(key, 15)

    # Case 1: D = 32 -> lane folding (fold = 4), lane-dense blocks, 2 grid steps.
    N, D = 64, 32
    x = jax.random.normal(keys[0], (N, D), dtype=jnp.float32)
    last_update = jax.random.uniform(keys[1], (N,), dtype=jnp.float32) * 10.0
    t = jax.random.uniform(keys[2], (N,), dtype=jnp.float32) * 10.0
    # NormalLinear init: normal(0, stdv), stdv = 1/sqrt(in_features) = 1.0
    stdv = 1.0 / math.sqrt(1.0)
    weight = jax.random.normal(keys[3], (D, 1), dtype=jnp.float32) * stdv
    bias = jax.random.normal(keys[4], (D,), dtype=jnp.float32) * stdv

    out = jax.block_until_ready(time_embedding(x, last_update, t, weight, bias))
    ref = _reference(x, last_update, t, weight, bias)
    assert out.shape == (N, D)
    assert jnp.allclose(out, ref, atol=1e-5, rtol=1e-5), "mismatch (fold path)"

    # Case 2: D = 256 (no fold) with ragged N -> pl.cdiv grid + Pallas-masked tail,
    #         no wrapper pad / output slice.
    N2, D2 = 100, 256
    x2 = jax.random.normal(keys[5], (N2, D2), dtype=jnp.float32)
    lu2 = jax.random.uniform(keys[6], (N2,), dtype=jnp.float32) * 10.0
    t2 = jax.random.uniform(keys[7], (N2,), dtype=jnp.float32) * 10.0
    w2 = jax.random.normal(keys[8], (D2, 1), dtype=jnp.float32)
    b2 = jax.random.normal(keys[9], (D2,), dtype=jnp.float32)

    out2 = jax.block_until_ready(time_embedding(x2, lu2, t2, w2, b2))
    ref2 = _reference(x2, lu2, t2, w2, b2)
    assert out2.shape == (N2, D2)
    assert jnp.allclose(out2, ref2, atol=1e-5, rtol=1e-5), "mismatch (ragged-N path)"

    # Case 3: bf16 x, D = 64 (fold = 2), ragged tail -> native-dtype multiply path.
    N3, D3 = 50, 64
    x3 = jax.random.normal(keys[10], (N3, D3), dtype=jnp.float32).astype(jnp.bfloat16)
    lu3 = jax.random.uniform(keys[11], (N3,), dtype=jnp.float32) * 10.0
    t3 = jax.random.uniform(keys[12], (N3,), dtype=jnp.float32) * 10.0
    w3 = jax.random.normal(keys[13], (D3, 1), dtype=jnp.float32)
    b3 = jax.random.normal(keys[14], (D3,), dtype=jnp.float32)

    out3 = jax.block_until_ready(time_embedding(x3, lu3, t3, w3, b3))
    ref3 = _reference(x3, lu3, t3, w3, b3)
    assert out3.shape == (N3, D3)
    assert jnp.allclose(out3.astype(jnp.float32), ref3.astype(jnp.float32),
                        atol=5e-2, rtol=5e-2), "mismatch (bf16 path)"

    print("KERNEL_OK")
</pallas_src>

<mosaic_0001>
module attributes {stable_mosaic.version = 11 : i64} {
  func.func @_time_embedding_kernel(%arg0: i32, %arg1: memref<8x4xf32, #tpu.memory_space<vmem>>, %arg2: memref<8x128xf32, #tpu.memory_space<vmem>>, %arg3: memref<2x128xf32, #tpu.memory_space<vmem>>, %arg4: memref<8x128xf32, #tpu.memory_space<vmem>>) attributes {dimension_semantics = [#tpu.dimension_semantics<parallel>], iteration_bounds = array<i64: 2>, scalar_prefetch = 0 : i64, scratch_operands = 0 : i64, tpu.core_type = #tpu.core_type<tc>, window_params = [{transform_indices = @transform_0, window_bounds = array<i64: 8, 4>}, {transform_indices = @transform_1, window_bounds = array<i64: 8, 128>}, {pipeline_mode = #tpu.pipeline_mode<synchronous>, transform_indices = @transform_2, window_bounds = array<i64: 2, 128>}, {transform_indices = @transform_3, window_bounds = array<i64: 8, 128>}]} {
    %c0 = arith.constant 0 : index
    %c0_0 = arith.constant 0 : index
    %0 = vector.load %arg1[%c0, %c0_0] : memref<8x4xf32, #tpu.memory_space<vmem>>, vector<8x4xf32>
    %1 = vector.extract_strided_slice %0 {offsets = [0, 0], sizes = [8, 1], strides = [1, 1]} : vector<8x4xf32> to vector<8x1xf32>
    %2 = vector.shape_cast %1 : vector<8x1xf32> to vector<8x1xf32>
    %3 = vector.broadcast %2 : vector<8x1xf32> to vector<8x32xf32>
    %4 = vector.extract_strided_slice %0 {offsets = [0, 1], sizes = [8, 1], strides = [1, 1]} : vector<8x4xf32> to vector<8x1xf32>
    %5 = vector.shape_cast %4 : vector<8x1xf32> to vector<8x1xf32>
    %6 = vector.broadcast %5 : vector<8x1xf32> to vector<8x32xf32>
    %7 = vector.extract_strided_slice %0 {offsets = [0, 2], sizes = [8, 1], strides = [1, 1]} : vector<8x4xf32> to vector<8x1xf32>
    %8 = vector.shape_cast %7 : vector<8x1xf32> to vector<8x1xf32>
    %9 = vector.broadcast %8 : vector<8x1xf32> to vector<8x32xf32>
    %10 = vector.extract_strided_slice %0 {offsets = [0, 3], sizes = [8, 1], strides = [1, 1]} : vector<8x4xf32> to vector<8x1xf32>
    %11 = vector.shape_cast %10 : vector<8x1xf32> to vector<8x1xf32>
    %12 = vector.broadcast %11 : vector<8x1xf32> to vector<8x32xf32>
    %13 = tpu.concatenate %3, %6, %9, %12 in 1 : vector<8x32xf32>, vector<8x32xf32>, vector<8x32xf32>, vector<8x32xf32> -> vector<8x128xf32>
    %c0_1 = arith.constant 0 : index
    %c0_2 = arith.constant 0 : index
    %14 = vector.load %arg3[%c0_1, %c0_2] : memref<2x128xf32, #tpu.memory_space<vmem>>, vector<1x128xf32>
    %15 = vector.broadcast %14 : vector<1x128xf32> to vector<8x128xf32>
    %16 = arith.mulf %13, %15 : vector<8x128xf32>
    %c1 = arith.constant 1 : index
    %c0_3 = arith.constant 0 : index
    %17 = vector.load %arg3[%c1, %c0_3] : memref<2x128xf32, #tpu.memory_space<vmem>>, vector<1x128xf32>
    %18 = vector.broadcast %17 : vector<1x128xf32> to vector<8x128xf32>
    %19 = arith.addf %16, %18 : vector<8x128xf32>
    %c0_4 = arith.constant 0 : index
    %c0_5 = arith.constant 0 : index
    %20 = vector.load %arg2[%c0_4, %c0_5] : memref<8x128xf32, #tpu.memory_space<vmem>>, vector<8x128xf32>
    %21 = arith.mulf %20, %19 : vector<8x128xf32>
    %c0_6 = arith.constant 0 : index
    %c0_7 = arith.constant 0 : index
    %22 = vector.load %arg4[%c0_6, %c0_7] : memref<8x128xf32, #tpu.memory_space<vmem>>, vector<8x128xf32>
    tpu.vector_store %arg4[%c0_6, %c0_7], %21 {strides = array<i32>} : memref<8x128xf32, #tpu.memory_space<vmem>>, vector<8x128xf32>,
    return
  }
  func.func @transform_0(%arg0: i32) -> (i32, i32) {
    %c0_i32 = arith.constant 0 : i32
    %c0_i32_0 = arith.constant 0 : i32
    return %arg0, %c0_i32 : i32, i32
  }
  func.func @transform_1(%arg0: i32) -> (i32, i32) {
    %c0_i32 = arith.constant 0 : i32
    %c0_i32_0 = arith.constant 0 : i32
    return %arg0, %c0_i32 : i32, i32
  }
  func.func @transform_2(%arg0: i32) -> (i32, i32) {
    %c0_i32 = arith.constant 0 : i32
    %c0_i32_0 = arith.constant 0 : i32
    %c0_i32_1 = arith.constant 0 : i32
    return %c0_i32, %c0_i32_0 : i32, i32
  }
  func.func @transform_3(%arg0: i32) -> (i32, i32) {
    %c0_i32 = arith.constant 0 : i32
    %c0_i32_0 = arith.constant 0 : i32
    return %arg0, %c0_i32 : i32, i32
  }
}

</mosaic_0001>

<llo_original>
// kernel: tpu_custom_call.1
$region0: #{tpu_custom_call.1}
  #allocation0 [shape = 'u32[]', space=smem, size = 0x4, offset = 0x4, fixed_abs, tag = 'smem constant byte address 0x4 - core index']
  #allocation1 [shape = 'u32[144,128]{1,0:T(1,128)}', space=vmem, size = 0x12000, scoped, tag = 'internal scratch']
  %s0 = inlined_call_operand.vmem [shape: f32[16,4], index: 0, kind: input, shape index: {}]
  %s1 = inlined_call_operand.vmem [shape: f32[16,128], index: 1, kind: input, shape index: {}]
  %s2 = inlined_call_operand.vmem [shape: f32[2,128], index: 2, kind: input, shape index: {}]
  %s3 = inlined_call_operand.hbm [shape: f32[16,128], index: 3, kind: output, shape index: {}]
  %s4 = sld [smem:[#allocation0]]
  $region45: #{tpu_custom_call.1} parent=0
    _
  %s6 = ssub.s32 1, %s4
  %s7 = scalar_select 0, %s6, %s4
  $region1: #{tpu_custom_call.1} parent=0
    #allocation2 [shape = 'u8[8192]{0}', space=vmem, size = 0x2000, scoped, tag = 'output window, operand 0']
    #allocation3 [shape = 's32[2]{0}', space=sflag, size = 0x8, scoped, tag = 'scoped memory for tpu_custom_call.1']
    %8 = vsyncpa [#allocation3], 0
    %s9 = scalar_lea.sflag [#allocation3], 1
    %10 = vsyncpa %s9, 0
    loop: start=0, step=1, limit=4
    $region2: #{tpu_custom_call.1} parent=1 // loop_pre_header
      _
    $region3: #{tpu_custom_call.1} parent=1 // loop_header
      %s12 = sphi 0, %s16
      %p13 = scmp.ge.s32.totalorder %s12, 4
      %s22 = sphi 0, %s24
      %s25 = sphi 0, %s22
      %s26 = sphi 0, %s25
      %s42 = sphi 0, %s26
      %s48 = sphi 0, %s50
      %s51 = sphi 0, %s48
      %s52 = sphi 0, %s51
      %s68 = sphi 0, %s52
      %s72 = sphi 0, %s72
      %s74 = sphi 0, %s72
      %s75 = sphi 0, %s74
      %s89 = sphi 0, %s75
      %s95 = sphi 0, %s97
      %s98 = sphi 0, %s95
      %s99 = sphi 0, %s98
      %s115 = sphi 0, %s99
    $region4: #{tpu_custom_call.1} parent=1 // loop_header_branch
      %15 = sbr.rel (%p13) target = $region8
    $region5: #{tpu_custom_call.1} parent=1 // loop_body
      %s17 = ssub.s32 %s12, 1
      %s18 = ssub.s32 %s12, 2
      %s19 = sadd.s32 %s12, 1
      %s20 = ssub.s32 %s12, %s19
      %p21 = scmp.eq.s32.totalorder %s20, 0
      %s23 = sadd.s32 %s22, 1
      %s24 = scalar_select %p21, %s22, %s23
      %p27 = pneg %p21
      %p28 = scmp.eq.s32.totalorder %s12, 1
      %p29 = por %p27, %p28
      %p30 = scmp.ne.s32.totalorder %s22, %s25
      %p31 = scmp.eq.s32.totalorder %s12, 0
      %p32 = por %p30, %p31
      %p33 = scmp.ne.s32.totalorder %s22, %s25
      %p34 = scmp.eq.s32.totalorder %s17, 1
      %p35 = por %p33, %p34
      %p36 = scmp.ne.s32.totalorder %s25, %s26
      %p37 = scmp.eq.s32.totalorder %s17, 0
      %p38 = por %p36, %p37
      %p39 = scmp.ne.s32.totalorder %s25, %s26
      %p40 = scmp.eq.s32.totalorder %s18, 1
      %p41 = por %p39, %p40
      %p43 = scmp.ne.s32.totalorder %s26, %s42
      %p44 = scmp.eq.s32.totalorder %s18, 0
      %p45 = por %p43, %p44
      %s46 = ssub.s32 %s12, %s19
      %p47 = scmp.eq.s32.totalorder %s46, 0
      %s49 = sadd.s32 %s48, 1
      %s50 = scalar_select %p47, %s48, %s49
      %p53 = pneg %p47
      %p54 = scmp.eq.s32.totalorder %s12, 1
      %p55 = por %p53, %p54
      %p56 = scmp.ne.s32.totalorder %s48, %s51
      %p57 = scmp.eq.s32.totalorder %s12, 0
      %p58 = por %p56, %p57
      %p59 = scmp.ne.s32.totalorder %s48, %s51
      %p60 = scmp.eq.s32.totalorder %s17, 1
      %p61 = por %p59, %p60
      %p62 = scmp.ne.s32.totalorder %s51, %s52
      %p63 = scmp.eq.s32.totalorder %s17, 0
      %p64 = por %p62, %p63
      %p65 = scmp.ne.s32.totalorder %s51, %s52
      %p66 = scmp.eq.s32.totalorder %s18, 1
      %p67 = por %p65, %p66
      %p69 = scmp.ne.s32.totalorder %s52, %s68
      %p70 = scmp.eq.s32.totalorder %s18, 0
      %p71 = por %p69, %p70
      %s73 = sadd.s32 %s72, 1
      %p76 = scmp.eq.s32.totalorder %s12, 1
      %p77 = scmp.ne.s32.totalorder %s72, %s74
      %p78 = scmp.eq.s32.totalorder %s12, 0
      %p79 = por %p77, %p78
      %p80 = scmp.ne.s32.totalorder %s72, %s74
      %p81 = scmp.eq.s32.totalorder %s17, 1
      %p82 = por %p80, %p81
      %p83 = scmp.ne.s32.totalorder %s74, %s75
      %p84 = scmp.eq.s32.totalorder %s17, 0
      %p85 = por %p83, %p84
      %p86 = scmp.ne.s32.totalorder %s74, %s75
      %p87 = scmp.eq.s32.totalorder %s18, 1
      %p88 = por %p86, %p87
      %p90 = scmp.ne.s32.totalorder %s75, %s89
      %p91 = scmp.eq.s32.totalorder %s18, 0
      %p92 = por %p90, %p91
      %s93 = ssub.s32 %s12, %s19
      %p94 = scmp.eq.s32.totalorder %s93, 0
      %s96 = sadd.s32 %s95, 1
      %s97 = scalar_select %p94, %s95, %s96
      %p100 = pneg %p94
      %p101 = scmp.eq.s32.totalorder %s12, 1
      %p102 = por %p100, %p101
      %p103 = scmp.ne.s32.totalorder %s95, %s98
      %p104 = scmp.eq.s32.totalorder %s12, 0
      %p105 = por %p103, %p104
      %p106 = scmp.ne.s32.totalorder %s95, %s98
      %p107 = scmp.eq.s32.totalorder %s17, 1
      %p108 = por %p106, %p107
      %p109 = scmp.ne.s32.totalorder %s98, %s99
      %p110 = scmp.eq.s32.totalorder %s17, 0
      %p111 = por %p109, %p110
      %p112 = scmp.ne.s32.totalorder %s98, %s99
      %p113 = scmp.eq.s32.totalorder %s18, 1
      %p114 = por %p112, %p113
      %p116 = scmp.ne.s32.totalorder %s99, %s115
      %p117 = scmp.eq.s32.totalorder %s18, 0
      %p118 = por %p116, %p117
      %p119 = scmp.le.s32.totalorder 1, %s12
      %p120 = scmp.lt.s32.totalorder %s12, 3
      %p121 = pnand %p119, %p120
      %p122 = pneg %p121
      // Predicated region
      $region9: #{tpu_custom_call.1} parent=5 // pred_check
        _
      $region10: #{tpu_custom_call.1} parent=5 // pred_check_branch
        %124 = sbr.rel (%p121) target = $region12
      $region11: #{tpu_custom_call.1} parent=5 // pred_region
        %s125 = ssub.s32 %s12, 1
        // Predicated region
        $region13: #{tpu_custom_call.1} parent=11 // pred_check
          %p126 = pneg %p85
        $region14: #{tpu_custom_call.1} parent=11 // pred_check_branch
          %128 = sbr.rel (%p126) target = $region16
        $region15: #{tpu_custom_call.1} parent=11 // pred_region
          _
        $region16: #{tpu_custom_call.1} parent=11 // pred_fallthru
          _
      $region12: #{tpu_custom_call.1} parent=5 // pred_fallthru
        _
      %p129 = scmp.lt.s32.totalorder %s12, 2
      // Predicated region
      $region17: #{tpu_custom_call.1} parent=5 // pred_check
        %p130 = pneg %p129
      $region18: #{tpu_custom_call.1} parent=5 // pred_check_branch
        %132 = sbr.rel (%p130) target = $region20
      $region19: #{tpu_custom_call.1} parent=5 // pred_region
        // Predicated region
        $region21: #{tpu_custom_call.1} parent=19 // pred_check
          %p133 = pneg %p32
        $region22: #{tpu_custom_call.1} parent=19 // pred_check_branch
          %135 = sbr.rel (%p133) target = $region24
        $region23: #{tpu_custom_call.1} parent=19 // pred_region
          %p136 = scmp.lt.s32.totalorder %s12, 1
          %s137 = scalar_select %p136, %s12, 1
          %s138 = smul.addr %s137, 8
          %s139 = scalar_lea.vmem %s0, %s138
        $region24: #{tpu_custom_call.1} parent=19 // pred_fallthru
          _
        // Predicated region
        $region25: #{tpu_custom_call.1} parent=19 // pred_check
          %p140 = pneg %p58
        $region26: #{tpu_custom_call.1} parent=19 // pred_check_branch
          %142 = sbr.rel (%p140) target = $region28
        $region27: #{tpu_custom_call.1} parent=19 // pred_region
          %p143 = scmp.lt.s32.totalorder %s12, 1
          %s144 = scalar_select %p143, %s12, 1
          %s145 = smul.addr %s144, 8
          %s146 = scalar_lea.vmem %s1, %s145
        $region28: #{tpu_custom_call.1} parent=19 // pred_fallthru
          _
      $region20: #{tpu_custom_call.1} parent=5 // pred_fallthru
        _
      %p147 = scmp.le.s32.totalorder 1, %s12
      %p148 = scmp.lt.s32.totalorder %s12, 3
      %p149 = pnand %p147, %p148
      %p150 = pneg %p149
      // Predicated region
      $region29: #{tpu_custom_call.1} parent=5 // pred_check
        _
      $region30: #{tpu_custom_call.1} parent=5 // pred_check_branch
        %152 = sbr.rel (%p149) target = $region32
      $region31: #{tpu_custom_call.1} parent=5 // pred_region
        %s153 = ssub.s32 %s12, 1
        %p154 = scmp.lt.s32.totalorder %s17, 1
        %s155 = scalar_select %p154, %s17, 1
        %s156 = smul.addr %s155, 8
        %s157 = scalar_lea.vmem %s0, %s156
        %p158 = pneg %p38
        %p159 = pneg %p35
        %p160 = scmp.lt.s32.totalorder %s17, 1
        %s161 = scalar_select %p160, %s17, 1
        %s162 = smul.addr %s161, 8
        %s163 = scalar_lea.vmem %s1, %s162
        %p164 = pneg %p64
        %p165 = pneg %p61
        %p166 = pneg %p85
        %p167 = pneg %p82
        %p168 = pneg %p111
        %p169 = pneg %p108
        %s170 = sand.u32 %s98, 1
        %s171 = scalar_lea.sflag [#allocation3], %s170
        %s172 = sand.u32 %s98, 1
        %s173 = smul.addr %s172, 8
        %s174 = scalar_lea.vmem [#allocation2], %s173
        %p175 = scmp.lt.s32.totalorder %s17, 1
        %s176 = scalar_select %p175, %s17, 1
        %s177 = smul.addr %s176, 8
        %s178 = scalar_lea.vmem %s0, %s177
        %p179 = scmp.lt.s32.totalorder %s17, 1
        %s180 = scalar_select %p179, %s17, 1
        %s181 = smul.addr %s180, 8
        %s182 = scalar_lea.vmem %s1, %s181
        %v183 = vld [vmem:[%s178] sm:$0xff]
        %185 = vset.pattern.permute.xlu0 0
        %186 = vperm.xlu0 %185, %v183
        %v187 = vpop.permute.xlu0 %186
        %189 = vset.pattern.permute.xlu0 1
        %190 = vperm.xlu0 %189, %v183
        %v191 = vpop.permute.xlu0 %190
        %193 = vset.pattern.permute.xlu0 2
        %194 = vperm.xlu0 %193, %v183
        %v195 = vpop.permute.xlu0 %194
        %197 = vset.pattern.permute.xlu0 3
        %198 = vperm.xlu0 %197, %v183
        %v199 = vpop.permute.xlu0 %198
        %vm201 = vcmask 261120
        %v202 = vsel %vm201, %v187, %v191
        %vm203 = vcmask 523264
        %v204 = vsel %vm203, %v202, %v195
        %vm205 = vcmask 785408
        %v206 = vsel %vm205, %v204, %v199
        %v207 = vld [vmem:[%s2] sm:$0x1]
        %v208 = vlaneseq
        %v209 = vshrl.u32 %v208, 7
        %v210 = vsub.s32 0, %v209
        %v211 = vrot.slane %v207, %v210
        %v212 = vmul.f32 %v206, %v211
        %v213 = vld [vmem:[%s2 + $0x1] sm:$0x1]
        %v214 = vlaneseq
        %v215 = vshrl.u32 %v214, 7
        %v216 = vsub.s32 0, %v215
        %v217 = vrot.slane %v213, %v216
        %v218 = vadd.f32 %v212, %v217
        %v219 = vld [vmem:[%s182] sm:$0xff]
        %v220 = vmul.f32 %v219, %v218
        %221 = vst [vmem:[%s174] sm:$0xff] %v220
        %s222 = sand.u32 %s98, 1
        %s223 = scalar_lea.sflag [#allocation3], %s222
        %s224 = sand.u32 %s98, 1
        %s225 = smul.addr %s224, 8
        %s226 = scalar_lea.vmem [#allocation2], %s225
        // Predicated region
        $region33: #{tpu_custom_call.1} parent=31 // pred_check
          %p227 = pneg %p108
        $region34: #{tpu_custom_call.1} parent=31 // pred_check_branch
          %229 = sbr.rel (%p227) target = $region36
        $region35: #{tpu_custom_call.1} parent=31 // pred_region
          %s231 = ssub.s32 128, 128
          %232 = vsyncadd %s223, %s231
          %s233 = smul.addr %s17, 128
          %s234 = scalar_lea.hbm %s3, %s233
          %s236 = sshll.u32 %s226, 4
          %s237 = int_to_ptr.vmem [resolvable:$true] %s236
          %239 = dma.vmem_to_hbm [thread:$0]  %s237, 128, %s234, %s223
        $region36: #{tpu_custom_call.1} parent=31 // pred_fallthru
          _
      $region32: #{tpu_custom_call.1} parent=5 // pred_fallthru
        _
      %p240 = scmp.le.s32.totalorder 2, %s12
      // Predicated region
      $region37: #{tpu_custom_call.1} parent=5 // pred_check
        %p241 = pneg %p240
      $region38: #{tpu_custom_call.1} parent=5 // pred_check_branch
        %243 = sbr.rel (%p241) target = $region40
      $region39: #{tpu_custom_call.1} parent=5 // pred_region
        %s244 = ssub.s32 %s12, 2
        // Predicated region
        $region41: #{tpu_custom_call.1} parent=39 // pred_check
          %p245 = pneg %p114
        $region42: #{tpu_custom_call.1} parent=39 // pred_check_branch
          %247 = sbr.rel (%p245) target = $region44
        $region43: #{tpu_custom_call.1} parent=39 // pred_region
          %s248 = sand.u32 %s99, 1
          %s249 = scalar_lea.sflag [#allocation3], %s248
          %s250 = sand.u32 %s99, 1
          %s251 = smul.addr %s250, 8
          %s252 = scalar_lea.vmem [#allocation2], %s251
          %253 = dma.done %s249, 128
        $region44: #{tpu_custom_call.1} parent=39 // pred_fallthru
          _
      $region40: #{tpu_custom_call.1} parent=5 // pred_fallthru
        _
    $region6: #{tpu_custom_call.1} parent=1 // loop_footer
      %s16 = sadd.s32 1, %s12
    $region7: #{tpu_custom_call.1} parent=1 // loop_footer_branch
      %11 = sbr.rel target = $region3
    $region8: #{tpu_custom_call.1} parent=1 // loop_exit
      _
    %254 = vsyncpa [#allocation3], 1
    %s255 = scalar_lea.sflag [#allocation3], 1
    %256 = vsyncpa %s255, 1

</llo_original>
